<compile_context>
chip_gen: v6e
topology: v6e:2x2x1
jax: 0.10.0
libtpu: 0.0.40
codegen_flags: <defaults>
</compile_context>

<pallas_src>
import jax
import jax.numpy as jnp
from jax import lax
from jax.experimental import pallas as pl
from jax.experimental.pallas import tpu as pltpu

LANES = 128   # lane-dense output slab width
H2 = 16       # fc2 output width (feat); fc3 logit lives in lane H2


def mlp_kernel(x_ref, w1_ref, b1_ref, wcat_ref, bcat_ref, out_ref):
    # ---- fc1 + ReLU (dropout = identity in eval mode) ----
    h1 = jnp.dot(x_ref[...], w1_ref[...], preferred_element_type=jnp.float32)
    h1 = jnp.maximum(h1 + b1_ref[...], 0.0)          # (TB, 32)

    # ---- fused fc2 / folded-fc3: one lane-dense (TB,32)@(32,128) matmul ----
    # lanes [0,16)  -> feat  (exactly h1 @ w2 + b2)
    # lane   16     -> fc3 logit via folded weights (h1 @ (w2@w3) + b2@w3 + b3)
    # lanes (16,128)-> zero padding (unmasked full-width store)
    slab = jnp.dot(h1, wcat_ref[...], preferred_element_type=jnp.float32)
    slab = slab + bcat_ref[...]                      # (TB, 128)

    # sigmoid only on the logit lane; other lanes pass through unchanged.
    lane = lax.broadcasted_iota(jnp.int32, slab.shape, dimension=1)
    out_ref[...] = jnp.where(lane == H2, jax.nn.sigmoid(slab), slab).astype(
        out_ref.dtype)


def network_forward(x, params, *, tile_b=256):
    """Full MLP in a single Pallas kernel, tiled over the (padded) batch axis."""
    w1, b1, w2, b2, w3, b3 = params
    N, D = x.shape
    H1 = w1.shape[1]          # 32
    assert w2.shape == (H1, H2)

    # ---- fold fc3 into a lane-dense combined second-layer weight ----
    w23 = w2 @ w3                                    # (32, 1)
    b23 = b2 @ w3 + b3                               # (1, 1)
    wcat = jnp.zeros((H1, LANES), jnp.float32)
    wcat = wcat.at[:, :H2].set(w2).at[:, H2:H2 + 1].set(w23)
    bcat = jnp.zeros((1, LANES), jnp.float32)
    bcat = bcat.at[:, :H2].set(b2).at[:, H2:H2 + 1].set(b23)

    # ---- choose batch tile (multiple of 8) and zero-pad the tail ----
    tb = min(tile_b, ((N + 7) // 8) * 8)
    tb = max(8, ((tb + 7) // 8) * 8)
    n_pad = ((N + tb - 1) // tb) * tb
    if n_pad != N:
        x = jnp.pad(x, ((0, n_pad - N), (0, 0)))

    grid = (n_pad // tb,)
    const2d = lambda shape: pl.BlockSpec(shape, lambda i: (0, 0))

    slab = pl.pallas_call(
        mlp_kernel,
        out_shape=jax.ShapeDtypeStruct((n_pad, LANES), jnp.float32),
        grid_spec=pltpu.PrefetchScalarGridSpec(
            num_scalar_prefetch=0,
            grid=grid,
            in_specs=[
                pl.BlockSpec((tb, D), lambda i: (i, 0)),   # x tile
                const2d((D, H1)),                          # fc1 weight
                const2d((1, H1)),                          # fc1 bias
                const2d((H1, LANES)),                      # fused fc2|fc3 weight
                const2d((1, LANES)),                       # fused fc2|fc3 bias
            ],
            out_specs=pl.BlockSpec((tb, LANES), lambda i: (i, 0)),
        ),
        compiler_params=pltpu.CompilerParams(
            dimension_semantics=("parallel",)),
    )(x, w1, b1, wcat, bcat)

    feat = slab[:N, :H2]
    out = slab[:N, H2:H2 + 1]
    return [out, feat]


def init_params(key, input_dim):
    """Deterministic parameter init matching the PyTorch Linear shapes.

    PyTorch stores Linear weights as (out, in); we store the transpose
    (in, out) so the kernel does x @ W directly.
    """
    ks = jax.random.split(key, 6)

    def uniform(k, shape, fan_in):
        bound = 1.0 / jnp.sqrt(fan_in)
        return jax.random.uniform(k, shape, jnp.float32, -bound, bound)

    w1 = uniform(ks[0], (input_dim, 32), input_dim)
    b1 = uniform(ks[1], (1, 32), input_dim)
    w2 = uniform(ks[2], (32, 16), 32)
    b2 = uniform(ks[3], (1, 16), 32)
    w3 = uniform(ks[4], (16, 1), 16)
    b3 = uniform(ks[5], (1, 1), 16)
    return (w1, b1, w2, b2, w3, b3)


def reference_forward(x, params):
    """Pure-JAX reference for correctness checking (dropout = identity)."""
    w1, b1, w2, b2, w3, b3 = params
    h1 = jnp.maximum(x @ w1 + b1, 0.0)
    feat = h1 @ w2 + b2
    out = jax.nn.sigmoid(feat @ w3 + b3)
    return [out, feat]


if __name__ == "__main__":
    key = jax.random.PRNGKey(0)
    k_x, k_p = jax.random.split(key)

    input_dim = 64
    batch = 500   # deliberately NOT a multiple of the tile -> exercises padding

    x = jax.random.normal(k_x, (batch, input_dim), jnp.float32)
    params = init_params(k_p, input_dim)

    out, feat = network_forward(x, params, tile_b=256)
    out = jax.block_until_ready(out)
    feat = jax.block_until_ready(feat)

    ref_out, ref_feat = reference_forward(x, params)
    assert out.shape == (batch, 1)
    assert feat.shape == (batch, 16)
    # feat uses the original w2/b2 columns -> tight tolerance; the folded fc3
    # changes matmul association slightly -> slightly looser tolerance.
    assert jnp.allclose(feat, ref_feat, atol=1e-5, rtol=1e-5)
    assert jnp.allclose(out, ref_out, atol=1e-4, rtol=1e-4)

    print("KERNEL_OK")
</pallas_src>

<mosaic_0001>
module attributes {stable_mosaic.version = 11 : i64} {
  func.func @mlp_kernel(%arg0: i32, %arg1: memref<256x64xf32, #tpu.memory_space<vmem>>, %arg2: memref<64x32xf32, #tpu.memory_space<vmem>>, %arg3: memref<1x32xf32, #tpu.memory_space<vmem>>, %arg4: memref<32x128xf32, #tpu.memory_space<vmem>>, %arg5: memref<1x128xf32, #tpu.memory_space<vmem>>, %arg6: memref<256x128xf32, #tpu.memory_space<vmem>>) attributes {dimension_semantics = [#tpu.dimension_semantics<parallel>], iteration_bounds = array<i64: 2>, scalar_prefetch = 0 : i64, scratch_operands = 0 : i64, tpu.core_type = #tpu.core_type<tc>, window_params = [{transform_indices = @transform_0, window_bounds = array<i64: 256, 64>}, {pipeline_mode = #tpu.pipeline_mode<synchronous>, transform_indices = @transform_1, window_bounds = array<i64: 64, 32>}, {pipeline_mode = #tpu.pipeline_mode<synchronous>, transform_indices = @transform_2, window_bounds = array<i64: 1, 32>}, {pipeline_mode = #tpu.pipeline_mode<synchronous>, transform_indices = @transform_3, window_bounds = array<i64: 32, 128>}, {pipeline_mode = #tpu.pipeline_mode<synchronous>, transform_indices = @transform_4, window_bounds = array<i64: 1, 128>}, {transform_indices = @transform_5, window_bounds = array<i64: 256, 128>}]} {
    %c0 = arith.constant 0 : index
    %c0_0 = arith.constant 0 : index
    %0 = vector.load %arg1[%c0, %c0_0] : memref<256x64xf32, #tpu.memory_space<vmem>>, vector<256x64xf32>
    %c0_1 = arith.constant 0 : index
    %c0_2 = arith.constant 0 : index
    %1 = vector.load %arg2[%c0_1, %c0_2] : memref<64x32xf32, #tpu.memory_space<vmem>>, vector<64x32xf32>
    %cst = arith.constant dense<0.000000e+00> : vector<256x32xf32>
    %2 = tpu.matmul %0, %1, %cst {dimension_numbers = #tpu.dot_dimension_numbers<[1], [0], [0], [1], [0, 0, 1, 1], [], []>} : vector<256x64xf32>, vector<64x32xf32>, vector<256x32xf32> -> vector<256x32xf32>
    %c0_3 = arith.constant 0 : index
    %c0_4 = arith.constant 0 : index
    %3 = vector.load %arg3[%c0_3, %c0_4] : memref<1x32xf32, #tpu.memory_space<vmem>>, vector<1x32xf32>
    %4 = vector.broadcast %3 : vector<1x32xf32> to vector<256x32xf32>
    %5 = arith.addf %2, %4 : vector<256x32xf32>
    %cst_5 = arith.constant 0.000000e+00 : f32
    %6 = vector.broadcast %cst_5 : f32 to vector<256x32xf32>
    %7 = arith.maximumf %5, %6 : vector<256x32xf32>
    %c0_6 = arith.constant 0 : index
    %c0_7 = arith.constant 0 : index
    %8 = vector.load %arg4[%c0_6, %c0_7] : memref<32x128xf32, #tpu.memory_space<vmem>>, vector<32x128xf32>
    %cst_8 = arith.constant dense<0.000000e+00> : vector<256x128xf32>
    %9 = tpu.matmul %7, %8, %cst_8 {dimension_numbers = #tpu.dot_dimension_numbers<[1], [0], [0], [1], [0, 0, 1, 1], [], []>} : vector<256x32xf32>, vector<32x128xf32>, vector<256x128xf32> -> vector<256x128xf32>
    %c0_9 = arith.constant 0 : index
    %c0_10 = arith.constant 0 : index
    %10 = vector.load %arg5[%c0_9, %c0_10] : memref<1x128xf32, #tpu.memory_space<vmem>>, vector<1x128xf32>
    %11 = vector.broadcast %10 : vector<1x128xf32> to vector<256x128xf32>
    %12 = arith.addf %9, %11 : vector<256x128xf32>
    %13 = tpu.iota {dimensions = array<i32: 1>} : vector<256x128xi32>
    %c16_i32 = arith.constant 16 : i32
    %14 = vector.broadcast %c16_i32 : i32 to vector<256x128xi32>
    %15 = arith.cmpi eq, %13, %14 : vector<256x128xi32>
    %16 = arith.negf %12 : vector<256x128xf32>
    %17 = math.exp %16 : vector<256x128xf32>
    %cst_11 = arith.constant 1.000000e+00 : f32
    %18 = vector.broadcast %cst_11 : f32 to vector<256x128xf32>
    %19 = arith.addf %18, %17 : vector<256x128xf32>
    %20 = arith.divf %18, %19 : vector<256x128xf32>
    %21 = arith.select %15, %20, %12 : vector<256x128xi1>, vector<256x128xf32>
    %c0_12 = arith.constant 0 : index
    %c0_13 = arith.constant 0 : index
    %22 = vector.load %arg6[%c0_12, %c0_13] : memref<256x128xf32, #tpu.memory_space<vmem>>, vector<256x128xf32>
    tpu.vector_store %arg6[%c0_12, %c0_13], %21 {strides = array<i32>} : memref<256x128xf32, #tpu.memory_space<vmem>>, vector<256x128xf32>,
    return
  }
  func.func @transform_0(%arg0: i32) -> (i32, i32) {
    %c0_i32 = arith.constant 0 : i32
    %c0_i32_0 = arith.constant 0 : i32
    return %arg0, %c0_i32 : i32, i32
  }
  func.func @transform_1(%arg0: i32) -> (i32, i32) {
    %c0_i32 = arith.constant 0 : i32
    %c0_i32_0 = arith.constant 0 : i32
    %c0_i32_1 = arith.constant 0 : i32
    return %c0_i32, %c0_i32_0 : i32, i32
  }
  func.func @transform_2(%arg0: i32) -> (i32, i32) {
    %c0_i32 = arith.constant 0 : i32
    %c0_i32_0 = arith.constant 0 : i32
    %c0_i32_1 = arith.constant 0 : i32
    return %c0_i32, %c0_i32_0 : i32, i32
  }
  func.func @transform_3(%arg0: i32) -> (i32, i32) {
    %c0_i32 = arith.constant 0 : i32
    %c0_i32_0 = arith.constant 0 : i32
    %c0_i32_1 = arith.constant 0 : i32
    return %c0_i32, %c0_i32_0 : i32, i32
  }
  func.func @transform_4(%arg0: i32) -> (i32, i32) {
    %c0_i32 = arith.constant 0 : i32
    %c0_i32_0 = arith.constant 0 : i32
    %c0_i32_1 = arith.constant 0 : i32
    return %c0_i32, %c0_i32_0 : i32, i32
  }
  func.func @transform_5(%arg0: i32) -> (i32, i32) {
    %c0_i32 = arith.constant 0 : i32
    %c0_i32_0 = arith.constant 0 : i32
    return %arg0, %c0_i32 : i32, i32
  }
}

</mosaic_0001>

<llo_original>
// kernel: tpu_custom_call.1
$region0: #{tpu_custom_call.1}
  #allocation0 [shape = 'u32[]', space=smem, size = 0x4, offset = 0x4, fixed_abs, tag = 'smem constant byte address 0x4 - core index']
  #allocation1 [shape = 'u32[144,128]{1,0:T(1,128)}', space=vmem, size = 0x12000, scoped, tag = 'internal scratch']
  %s0 = inlined_call_operand.vmem [shape: f32[512,64], index: 0, kind: input, shape index: {}]
  %s1 = inlined_call_operand.vmem [shape: f32[64,32], index: 1, kind: input, shape index: {}]
  %s2 = inlined_call_operand.vmem [shape: f32[1,32], index: 2, kind: input, shape index: {}]
  %s3 = inlined_call_operand.vmem [shape: f32[32,128], index: 3, kind: input, shape index: {}]
  %s4 = inlined_call_operand.vmem [shape: f32[1,128], index: 4, kind: input, shape index: {}]
  %s5 = inlined_call_operand.hbm [shape: f32[512,128], index: 5, kind: output, shape index: {}]
  %s6 = sld [smem:[#allocation0]]
  $region53: #{tpu_custom_call.1} parent=0
    _
  %s8 = ssub.s32 1, %s6
  %s9 = scalar_select 0, %s8, %s6
  $region1: #{tpu_custom_call.1} parent=0
    #allocation2 [shape = 'u8[262144]{0}', space=vmem, size = 0x40000, scoped, tag = 'output window, operand 0']
    #allocation3 [shape = 's32[2]{0}', space=sflag, size = 0x8, scoped, tag = 'scoped memory for tpu_custom_call.1']
    %10 = vsyncpa [#allocation3], 0
    %s11 = scalar_lea.sflag [#allocation3], 1
    %12 = vsyncpa %s11, 0
    loop: start=0, step=1, limit=4
    $region2: #{tpu_custom_call.1} parent=1 // loop_pre_header
      _
    $region3: #{tpu_custom_call.1} parent=1 // loop_header
      %s14 = sphi 0, %s18
      %p15 = scmp.ge.s32.totalorder %s14, 4
      %s24 = sphi 0, %s26
      %s27 = sphi 0, %s24
      %s28 = sphi 0, %s27
      %s44 = sphi 0, %s28
      %s48 = sphi 0, %s48
      %s50 = sphi 0, %s48
      %s51 = sphi 0, %s50
      %s65 = sphi 0, %s51
      %s69 = sphi 0, %s69
      %s71 = sphi 0, %s69
      %s72 = sphi 0, %s71
      %s86 = sphi 0, %s72
      %s90 = sphi 0, %s90
      %s92 = sphi 0, %s90
      %s93 = sphi 0, %s92
      %s107 = sphi 0, %s93
      %s111 = sphi 0, %s111
      %s113 = sphi 0, %s111
      %s114 = sphi 0, %s113
      %s128 = sphi 0, %s114
      %s134 = sphi 0, %s136
      %s137 = sphi 0, %s134
      %s138 = sphi 0, %s137
      %s154 = sphi 0, %s138
    $region4: #{tpu_custom_call.1} parent=1 // loop_header_branch
      %17 = sbr.rel (%p15) target = $region8
    $region5: #{tpu_custom_call.1} parent=1 // loop_body
      %s19 = ssub.s32 %s14, 1
      %s20 = ssub.s32 %s14, 2
      %s21 = sadd.s32 %s14, 1
      %s22 = ssub.s32 %s14, %s21
      %p23 = scmp.eq.s32.totalorder %s22, 0
      %s25 = sadd.s32 %s24, 1
      %s26 = scalar_select %p23, %s24, %s25
      %p29 = pneg %p23
      %p30 = scmp.eq.s32.totalorder %s14, 1
      %p31 = por %p29, %p30
      %p32 = scmp.ne.s32.totalorder %s24, %s27
      %p33 = scmp.eq.s32.totalorder %s14, 0
      %p34 = por %p32, %p33
      %p35 = scmp.ne.s32.totalorder %s24, %s27
      %p36 = scmp.eq.s32.totalorder %s19, 1
      %p37 = por %p35, %p36
      %p38 = scmp.ne.s32.totalorder %s27, %s28
      %p39 = scmp.eq.s32.totalorder %s19, 0
      %p40 = por %p38, %p39
      %p41 = scmp.ne.s32.totalorder %s27, %s28
      %p42 = scmp.eq.s32.totalorder %s20, 1
      %p43 = por %p41, %p42
      %p45 = scmp.ne.s32.totalorder %s28, %s44
      %p46 = scmp.eq.s32.totalorder %s20, 0
      %p47 = por %p45, %p46
      %s49 = sadd.s32 %s48, 1
      %p52 = scmp.eq.s32.totalorder %s14, 1
      %p53 = scmp.ne.s32.totalorder %s48, %s50
      %p54 = scmp.eq.s32.totalorder %s14, 0
      %p55 = por %p53, %p54
      %p56 = scmp.ne.s32.totalorder %s48, %s50
      %p57 = scmp.eq.s32.totalorder %s19, 1
      %p58 = por %p56, %p57
      %p59 = scmp.ne.s32.totalorder %s50, %s51
      %p60 = scmp.eq.s32.totalorder %s19, 0
      %p61 = por %p59, %p60
      %p62 = scmp.ne.s32.totalorder %s50, %s51
      %p63 = scmp.eq.s32.totalorder %s20, 1
      %p64 = por %p62, %p63
      %p66 = scmp.ne.s32.totalorder %s51, %s65
      %p67 = scmp.eq.s32.totalorder %s20, 0
      %p68 = por %p66, %p67
      %s70 = sadd.s32 %s69, 1
      %p73 = scmp.eq.s32.totalorder %s14, 1
      %p74 = scmp.ne.s32.totalorder %s69, %s71
      %p75 = scmp.eq.s32.totalorder %s14, 0
      %p76 = por %p74, %p75
      %p77 = scmp.ne.s32.totalorder %s69, %s71
      %p78 = scmp.eq.s32.totalorder %s19, 1
      %p79 = por %p77, %p78
      %p80 = scmp.ne.s32.totalorder %s71, %s72
      %p81 = scmp.eq.s32.totalorder %s19, 0
      %p82 = por %p80, %p81
      %p83 = scmp.ne.s32.totalorder %s71, %s72
      %p84 = scmp.eq.s32.totalorder %s20, 1
      %p85 = por %p83, %p84
      %p87 = scmp.ne.s32.totalorder %s72, %s86
      %p88 = scmp.eq.s32.totalorder %s20, 0
      %p89 = por %p87, %p88
      %s91 = sadd.s32 %s90, 1
      %p94 = scmp.eq.s32.totalorder %s14, 1
      %p95 = scmp.ne.s32.totalorder %s90, %s92
      %p96 = scmp.eq.s32.totalorder %s14, 0
      %p97 = por %p95, %p96
      %p98 = scmp.ne.s32.totalorder %s90, %s92
      %p99 = scmp.eq.s32.totalorder %s19, 1
      %p100 = por %p98, %p99
      %p101 = scmp.ne.s32.totalorder %s92, %s93
      %p102 = scmp.eq.s32.totalorder %s19, 0
      %p103 = por %p101, %p102
      %p104 = scmp.ne.s32.totalorder %s92, %s93
      %p105 = scmp.eq.s32.totalorder %s20, 1
      %p106 = por %p104, %p105
      %p108 = scmp.ne.s32.totalorder %s93, %s107
      %p109 = scmp.eq.s32.totalorder %s20, 0
      %p110 = por %p108, %p109
      %s112 = sadd.s32 %s111, 1
      %p115 = scmp.eq.s32.totalorder %s14, 1
      %p116 = scmp.ne.s32.totalorder %s111, %s113
      %p117 = scmp.eq.s32.totalorder %s14, 0
      %p118 = por %p116, %p117
      %p119 = scmp.ne.s32.totalorder %s111, %s113
      %p120 = scmp.eq.s32.totalorder %s19, 1
      %p121 = por %p119, %p120
      %p122 = scmp.ne.s32.totalorder %s113, %s114
      %p123 = scmp.eq.s32.totalorder %s19, 0
      %p124 = por %p122, %p123
      %p125 = scmp.ne.s32.totalorder %s113, %s114
      %p126 = scmp.eq.s32.totalorder %s20, 1
      %p127 = por %p125, %p126
      %p129 = scmp.ne.s32.totalorder %s114, %s128
      %p130 = scmp.eq.s32.totalorder %s20, 0
      %p131 = por %p129, %p130
      %s132 = ssub.s32 %s14, %s21
      %p133 = scmp.eq.s32.totalorder %s132, 0
      %s135 = sadd.s32 %s134, 1
      %s136 = scalar_select %p133, %s134, %s135
      %p139 = pneg %p133
      %p140 = scmp.eq.s32.totalorder %s14, 1
      %p141 = por %p139, %p140
      %p142 = scmp.ne.s32.totalorder %s134, %s137
      %p143 = scmp.eq.s32.totalorder %s14, 0
      %p144 = por %p142, %p143
      %p145 = scmp.ne.s32.totalorder %s134, %s137
      %p146 = scmp.eq.s32.totalorder %s19, 1
      %p147 = por %p145, %p146
      %p148 = scmp.ne.s32.totalorder %s137, %s138
      %p149 = scmp.eq.s32.totalorder %s19, 0
      %p150 = por %p148, %p149
      %p151 = scmp.ne.s32.totalorder %s137, %s138
      %p152 = scmp.eq.s32.totalorder %s20, 1
      %p153 = por %p151, %p152
      %p155 = scmp.ne.s32.totalorder %s138, %s154
      %p156 = scmp.eq.s32.totalorder %s20, 0
      %p157 = por %p155, %p156
      %p158 = scmp.le.s32.totalorder 1, %s14
      %p159 = scmp.lt.s32.totalorder %s14, 3
      %p160 = pnand %p158, %p159
      %p161 = pneg %p160
      // Predicated region
      $region9: #{tpu_custom_call.1} parent=5 // pred_check
        _
      $region10: #{tpu_custom_call.1} parent=5 // pred_check_branch
        %163 = sbr.rel (%p160) target = $region12
      $region11: #{tpu_custom_call.1} parent=5 // pred_region
        %s164 = ssub.s32 %s14, 1
        // Predicated region
        $region13: #{tpu_custom_call.1} parent=11 // pred_check
          %p165 = pneg %p61
        $region14: #{tpu_custom_call.1} parent=11 // pred_check_branch
          %167 = sbr.rel (%p165) target = $region16
        $region15: #{tpu_custom_call.1} parent=11 // pred_region
          _
        $region16: #{tpu_custom_call.1} parent=11 // pred_fallthru
          _
        // Predicated region
        $region17: #{tpu_custom_call.1} parent=11 // pred_check
          %p168 = pneg %p82
        $region18: #{tpu_custom_call.1} parent=11 // pred_check_branch
          %170 = sbr.rel (%p168) target = $region20
        $region19: #{tpu_custom_call.1} parent=11 // pred_region
          _
        $region20: #{tpu_custom_call.1} parent=11 // pred_fallthru
          _
        // Predicated region
        $region21: #{tpu_custom_call.1} parent=11 // pred_check
          %p171 = pneg %p103
        $region22: #{tpu_custom_call.1} parent=11 // pred_check_branch
          %173 = sbr.rel (%p171) target = $region24
        $region23: #{tpu_custom_call.1} parent=11 // pred_region
          _
        $region24: #{tpu_custom_call.1} parent=11 // pred_fallthru
          _
        // Predicated region
        $region25: #{tpu_custom_call.1} parent=11 // pred_check
          %p174 = pneg %p124
        $region26: #{tpu_custom_call.1} parent=11 // pred_check_branch
          %176 = sbr.rel (%p174) target = $region28
        $region27: #{tpu_custom_call.1} parent=11 // pred_region
          _
        $region28: #{tpu_custom_call.1} parent=11 // pred_fallthru
          _
      $region12: #{tpu_custom_call.1} parent=5 // pred_fallthru
        _
      %p177 = scmp.lt.s32.totalorder %s14, 2
      // Predicated region
      $region29: #{tpu_custom_call.1} parent=5 // pred_check
        %p178 = pneg %p177
      $region30: #{tpu_custom_call.1} parent=5 // pred_check_branch
        %180 = sbr.rel (%p178) target = $region32
      $region31: #{tpu_custom_call.1} parent=5 // pred_region
        // Predicated region
        $region33: #{tpu_custom_call.1} parent=31 // pred_check
          %p181 = pneg %p34
        $region34: #{tpu_custom_call.1} parent=31 // pred_check_branch
          %183 = sbr.rel (%p181) target = $region36
        $region35: #{tpu_custom_call.1} parent=31 // pred_region
          %s184 = smul.u32 32, %s14
          %p185 = scmp.lt.s32.totalorder %s184, 63
          %s186 = scalar_select %p185, %s184, 63
          %s187 = smul.addr %s186, 8
          %s188 = scalar_lea.vmem %s0, %s187
          %s189 = smul.u32 32, %s14
        $region36: #{tpu_custom_call.1} parent=31 // pred_fallthru
          _
      $region32: #{tpu_custom_call.1} parent=5 // pred_fallthru
        _
      %p190 = scmp.le.s32.totalorder 1, %s14
      %p191 = scmp.lt.s32.totalorder %s14, 3
      %p192 = pnand %p190, %p191
      %p193 = pneg %p192
      // Predicated region
      $region37: #{tpu_custom_call.1} parent=5 // pred_check
        _
      $region38: #{tpu_custom_call.1} parent=5 // pred_check_branch
        %195 = sbr.rel (%p192) target = $region40
      $region39: #{tpu_custom_call.1} parent=5 // pred_region
        %s196 = ssub.s32 %s14, 1
        %s197 = smul.u32 32, %s19
        %p198 = scmp.lt.s32.totalorder %s197, 63
        %s199 = scalar_select %p198, %s197, 63
        %s200 = smul.addr %s199, 8
        %s201 = scalar_lea.vmem %s0, %s200
        %p202 = pneg %p40
        %p203 = pneg %p37
        %p204 = pneg %p61
        %p205 = pneg %p58
        %p206 = pneg %p82
        %p207 = pneg %p79
        %p208 = pneg %p103
        %p209 = pneg %p100
        %p210 = pneg %p124
        %p211 = pneg %p121
        %p212 = pneg %p150
        %p213 = pneg %p147
        %s214 = sand.u32 %s137, 1
        %s215 = scalar_lea.sflag [#allocation3], %s214
        %s216 = sand.u32 %s137, 1
        %s217 = smul.addr %s216, 256
        %s218 = scalar_lea.vmem [#allocation2], %s217
        %s219 = smul.u32 32, %s19
        %p220 = scmp.lt.s32.totalorder %s219, 63
        %s221 = scalar_select %p220, %s219, 63
        %s222 = smul.addr %s221, 8
        %s223 = scalar_lea.vmem %s0, %s222
        %s224 = smul.u32 32, %s19
        %s225 = smul.u32 32, %s19
        %v226 = vld [vmem:[%s223] sm:$0xff]
        %v227 = vld [vmem:[%s223 + $0x8] sm:$0xff]
        %v228 = vld [vmem:[%s223 + $0x10] sm:$0xff]
        %v229 = vld [vmem:[%s223 + $0x18] sm:$0xff]
        %v230 = vld [vmem:[%s223 + $0x20] sm:$0xff]
        %v231 = vld [vmem:[%s223 + $0x28] sm:$0xff]
        %v232 = vld [vmem:[%s223 + $0x30] sm:$0xff]
        %v233 = vld [vmem:[%s223 + $0x38] sm:$0xff]
        %v234 = vld [vmem:[%s223 + $0x40] sm:$0xff]
        %v235 = vld [vmem:[%s223 + $0x48] sm:$0xff]
        %v236 = vld [vmem:[%s223 + $0x50] sm:$0xff]
        %v237 = vld [vmem:[%s223 + $0x58] sm:$0xff]
        %v238 = vld [vmem:[%s223 + $0x60] sm:$0xff]
        %v239 = vld [vmem:[%s223 + $0x68] sm:$0xff]
        %v240 = vld [vmem:[%s223 + $0x70] sm:$0xff]
        %v241 = vld [vmem:[%s223 + $0x78] sm:$0xff]
        %v242 = vld [vmem:[%s223 + $0x80] sm:$0xff]
        %v243 = vld [vmem:[%s223 + $0x88] sm:$0xff]
        %v244 = vld [vmem:[%s223 + $0x90] sm:$0xff]
        %v245 = vld [vmem:[%s223 + $0x98] sm:$0xff]
        %v246 = vld [vmem:[%s223 + $0xa0] sm:$0xff]
        %v247 = vld [vmem:[%s223 + $0xa8] sm:$0xff]
        %v248 = vld [vmem:[%s223 + $0xb0] sm:$0xff]
        %v249 = vld [vmem:[%s223 + $0xb8] sm:$0xff]
        %v250 = vld [vmem:[%s223 + $0xc0] sm:$0xff]
        %v251 = vld [vmem:[%s223 + $0xc8] sm:$0xff]
        %v252 = vld [vmem:[%s223 + $0xd0] sm:$0xff]
        %v253 = vld [vmem:[%s223 + $0xd8] sm:$0xff]
        %v254 = vld [vmem:[%s223 + $0xe0] sm:$0xff]
        %v255 = vld [vmem:[%s223 + $0xe8] sm:$0xff]
        %v256 = vld [vmem:[%s223 + $0xf0] sm:$0xff]
        %v257 = vld [vmem:[%s223 + $0xf8] sm:$0xff]
        %v258 = vld [vmem:[%s1] sm:$0xff]
        %v259 = vld [vmem:[%s1 + $0x8] sm:$0xff]
        %v260 = vld [vmem:[%s1 + $0x10] sm:$0xff]
        %v261 = vld [vmem:[%s1 + $0x18] sm:$0xff]
        %v262 = vld [vmem:[%s1 + $0x20] sm:$0xff]
        %v263 = vld [vmem:[%s1 + $0x28] sm:$0xff]
        %v264 = vld [vmem:[%s1 + $0x30] sm:$0xff]
        %v265 = vld [vmem:[%s1 + $0x38] sm:$0xff]
        %v266 = vld [vmem:[%s2] sm:$0x1]
        %v268 = vlaneseq
        %v269 = vshrl.u32 %v268, 7
        %v270 = vsub.s32 0, %v269
        %v271 = vrot.slane %v266, %v270
        %vm273 = vcmask 523264
        %v275 = vsel %vm273, %v226, 0
        %v278 = vsel %vm273, %v227, 0
        %v281 = vsel %vm273, %v228, 0
        %v284 = vsel %vm273, %v229, 0
        %v287 = vsel %vm273, %v230, 0
        %v290 = vsel %vm273, %v231, 0
        %v293 = vsel %vm273, %v232, 0
        %v296 = vsel %vm273, %v233, 0
        %v299 = vsel %vm273, %v234, 0
        %v302 = vsel %vm273, %v235, 0
        %v305 = vsel %vm273, %v236, 0
        %v308 = vsel %vm273, %v237, 0
        %v311 = vsel %vm273, %v238, 0
        %v314 = vsel %vm273, %v239, 0
        %v317 = vsel %vm273, %v240, 0
        %v320 = vsel %vm273, %v241, 0
        %v323 = vsel %vm273, %v242, 0
        %v326 = vsel %vm273, %v243, 0
        %v329 = vsel %vm273, %v244, 0
        %v332 = vsel %vm273, %v245, 0
        %v335 = vsel %vm273, %v246, 0
        %v338 = vsel %vm273, %v247, 0
        %v341 = vsel %vm273, %v248, 0
        %v344 = vsel %vm273, %v249, 0
        %v347 = vsel %vm273, %v250, 0
        %v350 = vsel %vm273, %v251, 0
        %v353 = vsel %vm273, %v252, 0
        %v356 = vsel %vm273, %v253, 0
        %v359 = vsel %vm273, %v254, 0
        %v362 = vsel %vm273, %v255, 0
        %v365 = vsel %vm273, %v256, 0
        %v368 = vsel %vm273, %v257, 0
        %370 = vmatprep.subr.mxu0 0.0
        %371 = vmatpush1.msra.mxu0 0.0
        %372 = vmatprep.subr.mxu0 0.0
        %373 = vmatpush1.msra.mxu0 0.0
        %374 = vmatprep.subr.mxu0 0.0
        %375 = vmatpush1.msra.mxu0 0.0
        %376 = vmatprep.subr.mxu0 0.0
        %377 = vmatpush1.msra.mxu0 0.0
        %378 = vmatprep.subr.mxu0 0.0
        %379 = vmatpush1.msra.mxu0 0.0
        %380 = vmatprep.subr.mxu0 0.0
        %381 = vmatpush1.msra.mxu0 0.0
        %382 = vmatprep.subr.mxu0 0.0
        %383 = vmatpush1.msra.mxu0 0.0
        %384 = vmatprep.subr.mxu0 0.0
        %385 = vmatpush1.msra.mxu0 0.0
        %386 = vmatprep.subr.mxu0 0.0
        %387 = vmatpush1.msra.mxu0 %v265
        %388 = vmatprep.subr.mxu0 0.0
        %389 = vmatpush1.msra.mxu0 %v264
        %390 = vmatprep.subr.mxu0 0.0
        %391 = vmatpush1.msra.mxu0 %v263
        %392 = vmatprep.subr.mxu0 0.0
        %393 = vmatpush1.msra.mxu0 %v262
        %394 = vmatprep.subr.mxu0 0.0
        %395 = vmatpush1.msra.mxu0 %v261
        %396 = vmatprep.subr.mxu0 0.0
        %397 = vmatpush1.msra.mxu0 %v260
        %398 = vmatprep.subr.mxu0 0.0
        %399 = vmatpush1.msra.mxu0 %v259
        %400 = vmatprep.subr.mxu0 0.0
        %401 = vmatpush1.msra.mxu0 %v258
        %402 = vmatprep.subr.mxu0 0.0
        %403 = vmatpush2.msra.mxu0 0.0
        %404 = vmatprep.subr.mxu0 0.0
        %405 = vmatpush2.msra.mxu0 0.0
        %406 = vmatprep.subr.mxu0 0.0
        %407 = vmatpush2.msra.mxu0 0.0
        %408 = vmatprep.subr.mxu0 0.0
        %409 = vmatpush2.msra.mxu0 0.0
        %410 = vmatprep.subr.mxu0 0.0
        %411 = vmatpush2.msra.mxu0 0.0
        %412 = vmatprep.subr.mxu0 0.0
        %413 = vmatpush2.msra.mxu0 0.0
        %414 = vmatprep.subr.mxu0 0.0
        %415 = vmatpush2.msra.mxu0 0.0
        %416 = vmatprep.subr.mxu0 0.0
        %417 = vmatpush2.msra.mxu0 0.0
        %418 = vmatprep.subr.mxu0 0.0
        %419 = vmatpush2.msra.mxu0 0.0
        %420 = vmatprep.subr.mxu0 0.0
        %421 = vmatpush2.msra.mxu0 0.0
        %422 = vmatprep.subr.mxu0 0.0
        %423 = vmatpush2.msra.mxu0 0.0
        %424 = vmatprep.subr.mxu0 0.0
        %425 = vmatpush2.msra.mxu0 0.0
        %426 = vmatprep.subr.mxu0 0.0
        %427 = vmatpush2.msra.mxu0 0.0
        %428 = vmatprep.subr.mxu0 0.0
        %429 = vmatpush2.msra.mxu0 0.0
        %430 = vmatprep.subr.mxu0 0.0
        %431 = vmatpush2.msra.mxu0 0.0
        %432 = vmatprep.subr.mxu0 0.0
        %433 = vmatpush2.msra.mxu0 0.0
        %434 = vmatprep.mubr.f32.mxu0 0.0
        %435 = vmatmul.mubr.f32.gmra.mxu0 %v275
        %v436 = vpop.f32.mrf.mxu0
        %v437 = vadd.f32 %v271, %v436
        %v438 = vpop.f32.mrf.mxu0
        %439 = vmatprep.mubr.f32.mxu0 0.0
        %440 = vmatmul.mubr.f32.gmra.mxu0 %v278
        %v441 = vpop.f32.mrf.mxu0
        %v442 = vadd.f32 %v271, %v441
        %v443 = vpop.f32.mrf.mxu0
        %444 = vmatprep.mubr.f32.mxu0 0.0
        %445 = vmatmul.mubr.f32.gmra.mxu0 %v281
        %v446 = vpop.f32.mrf.mxu0
        %v447 = vadd.f32 %v271, %v446
        %v448 = vpop.f32.mrf.mxu0
        %449 = vmatprep.mubr.f32.mxu0 0.0
        %450 = vmatmul.mubr.f32.gmra.mxu0 %v284
        %v451 = vpop.f32.mrf.mxu0
        %v452 = vadd.f32 %v271, %v451
        %v453 = vpop.f32.mrf.mxu0
        %454 = vmatprep.mubr.f32.mxu0 0.0
        %455 = vmatmul.mubr.f32.gmra.mxu0 %v287
        %v456 = vpop.f32.mrf.mxu0
        %v457 = vadd.f32 %v271, %v456
        %v458 = vpop.f32.mrf.mxu0
        %459 = vmatprep.mubr.f32.mxu0 0.0
        %460 = vmatmul.mubr.f32.gmra.mxu0 %v290
        %v461 = vpop.f32.mrf.mxu0
        %v462 = vadd.f32 %v271, %v461
        %v463 = vpop.f32.mrf.mxu0
        %464 = vmatprep.mubr.f32.mxu0 0.0
        %465 = vmatmul.mubr.f32.gmra.mxu0 %v293
        %v466 = vpop.f32.mrf.mxu0
        %v467 = vadd.f32 %v271, %v466
        %v468 = vpop.f32.mrf.mxu0
        %469 = vmatprep.mubr.f32.mxu0 0.0
        %470 = vmatmul.mubr.f32.gmra.mxu0 %v296
        %v471 = vpop.f32.mrf.mxu0
        %v472 = vadd.f32 %v271, %v471
        %v473 = vpop.f32.mrf.mxu0
        %474 = vmatprep.mubr.f32.mxu0 0.0
        %475 = vmatmul.mubr.f32.gmra.mxu0 %v299
        %v476 = vpop.f32.mrf.mxu0
        %v477 = vadd.f32 %v271, %v476
        %v478 = vpop.f32.mrf.mxu0
        %479 = vmatprep.mubr.f32.mxu0 0.0
        %480 = vmatmul.mubr.f32.gmra.mxu0 %v302
        %v481 = vpop.f32.mrf.mxu0
        %v482 = vadd.f32 %v271, %v481
        %v483 = vpop.f32.mrf.mxu0
        %484 = vmatprep.mubr.f32.mxu0 0.0
        %485 = vmatmul.mubr.f32.gmra.mxu0 %v305
        %v486 = vpop.f32.mrf.mxu0
        %v487 = vadd.f32 %v271, %v486
        %v488 = vpop.f32.mrf.mxu0
        %489 = vmatprep.mubr.f32.mxu0 0.0
        %490 = vmatmul.mubr.f32.gmra.mxu0 %v308
        %v491 = vpop.f32.mrf.mxu0
        %v492 = vadd.f32 %v271, %v491
        %v493 = vpop.f32.mrf.mxu0
        %494 = vmatprep.mubr.f32.mxu0 0.0
        %495 = vmatmul.mubr.f32.gmra.mxu0 %v311
        %v496 = vpop.f32.mrf.mxu0
        %v497 = vadd.f32 %v271, %v496
        %v498 = vpop.f32.mrf.mxu0
        %499 = vmatprep.mubr.f32.mxu0 0.0
        %500 = vmatmul.mubr.f32.gmra.mxu0 %v314
        %v501 = vpop.f32.mrf.mxu0
        %v502 = vadd.f32 %v271, %v501
        %v503 = vpop.f32.mrf.mxu0
        %504 = vmatprep.mubr.f32.mxu0 0.0
        %505 = vmatmul.mubr.f32.gmra.mxu0 %v317
        %v506 = vpop.f32.mrf.mxu0
        %v507 = vadd.f32 %v271, %v506
        %v508 = vpop.f32.mrf.mxu0
        %509 = vmatprep.mubr.f32.mxu0 0.0
        %510 = vmatmul.mubr.f32.gmra.mxu0 %v320
        %v511 = vpop.f32.mrf.mxu0
        %v512 = vadd.f32 %v271, %v511
        %v513 = vpop.f32.mrf.mxu0
        %514 = vmatprep.mubr.f32.mxu0 0.0
        %515 = vmatmul.mubr.f32.gmra.mxu0 %v323
        %v516 = vpop.f32.mrf.mxu0
        %v517 = vadd.f32 %v271, %v516
        %v518 = vpop.f32.mrf.mxu0
        %519 = vmatprep.mubr.f32.mxu0 0.0
        %520 = vmatmul.mubr.f32.gmra.mxu0 %v326
        %v521 = vpop.f32.mrf.mxu0
        %v522 = vadd.f32 %v271, %v521
        %v523 = vpop.f32.mrf.mxu0
        %524 = vmatprep.mubr.f32.mxu0 0.0
        %525 = vmatmul.mubr.f32.gmra.mxu0 %v329
        %v526 = vpop.f32.mrf.mxu0
        %v527 = vadd.f32 %v271, %v526
        %v528 = vpop.f32.mrf.mxu0
        %529 = vmatprep.mubr.f32.mxu0 0.0
        %530 = vmatmul.mubr.f32.gmra.mxu0 %v332
        %v531 = vpop.f32.mrf.mxu0
        %v532 = vadd.f32 %v271, %v531
        %v533 = vpop.f32.mrf.mxu0
        %534 = vmatprep.mubr.f32.mxu0 0.0
        %535 = vmatmul.mubr.f32.gmra.mxu0 %v335
        %v536 = vpop.f32.mrf.mxu0
        %v537 = vadd.f32 %v271, %v536
        %v538 = vpop.f32.mrf.mxu0
        %539 = vmatprep.mubr.f32.mxu0 0.0
        %540 = vmatmul.mubr.f32.gmra.mxu0 %v338
        %v541 = vpop.f32.mrf.mxu0
        %v542 = vadd.f32 %v271, %v541
        %v543 = vpop.f32.mrf.mxu0
        %544 = vmatprep.mubr.f32.mxu0 0.0
        %545 = vmatmul.mubr.f32.gmra.mxu0 %v341
        %v546 = vpop.f32.mrf.mxu0
        %v547 = vadd.f32 %v271, %v546
        %v548 = vpop.f32.mrf.mxu0
        %549 = vmatprep.mubr.f32.mxu0 0.0
        %550 = vmatmul.mubr.f32.gmra.mxu0 %v344
        %v551 = vpop.f32.mrf.mxu0
        %v552 = vadd.f32 %v271, %v551
        %v553 = vpop.f32.mrf.mxu0
        %554 = vmatprep.mubr.f32.mxu0 0.0
        %555 = vmatmul.mubr.f32.gmra.mxu0 %v347
        %v556 = vpop.f32.mrf.mxu0
        %v557 = vadd.f32 %v271, %v556
        %v558 = vpop.f32.mrf.mxu0
        %559 = vmatprep.mubr.f32.mxu0 0.0
        %560 = vmatmul.mubr.f32.gmra.mxu0 %v350
        %v561 = vpop.f32.mrf.mxu0
        %v562 = vadd.f32 %v271, %v561
        %v563 = vpop.f32.mrf.mxu0
        %564 = vmatprep.mubr.f32.mxu0 0.0
        %565 = vmatmul.mubr.f32.gmra.mxu0 %v353
        %v566 = vpop.f32.mrf.mxu0
        %v567 = vadd.f32 %v271, %v566
        %v568 = vpop.f32.mrf.mxu0
        %569 = vmatprep.mubr.f32.mxu0 0.0
        %570 = vmatmul.mubr.f32.gmra.mxu0 %v356
        %v571 = vpop.f32.mrf.mxu0
        %v572 = vadd.f32 %v271, %v571
        %v573 = vpop.f32.mrf.mxu0
        %574 = vmatprep.mubr.f32.mxu0 0.0
        %575 = vmatmul.mubr.f32.gmra.mxu0 %v359
        %v576 = vpop.f32.mrf.mxu0
        %v577 = vadd.f32 %v271, %v576
        %v578 = vpop.f32.mrf.mxu0
        %579 = vmatprep.mubr.f32.mxu0 0.0
        %580 = vmatmul.mubr.f32.gmra.mxu0 %v362
        %v581 = vpop.f32.mrf.mxu0
        %v582 = vadd.f32 %v271, %v581
        %v583 = vpop.f32.mrf.mxu0
        %584 = vmatprep.mubr.f32.mxu0 0.0
        %585 = vmatmul.mubr.f32.gmra.mxu0 %v365
        %v586 = vpop.f32.mrf.mxu0
        %v587 = vadd.f32 %v271, %v586
        %v588 = vpop.f32.mrf.mxu0
        %589 = vmatprep.mubr.f32.mxu0 0.0
        %590 = vmatmul.mubr.f32.gmra.mxu0 %v368
        %v591 = vpop.f32.mrf.mxu0
        %v592 = vadd.f32 %v271, %v591
        %v593 = vpop.f32.mrf.mxu0
        %594 = vdwg.mxu0
        %v595 = vmax.f32 %v437, 0.0
        %v596 = vmax.f32 %v442, 0.0
        %v597 = vmax.f32 %v447, 0.0
        %v598 = vmax.f32 %v452, 0.0
        %v599 = vmax.f32 %v457, 0.0
        %v600 = vmax.f32 %v462, 0.0
        %v601 = vmax.f32 %v467, 0.0
        %v602 = vmax.f32 %v472, 0.0
        %v603 = vmax.f32 %v477, 0.0
        %v604 = vmax.f32 %v482, 0.0
        %v605 = vmax.f32 %v487, 0.0
        %v606 = vmax.f32 %v492, 0.0
        %v607 = vmax.f32 %v497, 0.0
        %v608 = vmax.f32 %v502, 0.0
        %v609 = vmax.f32 %v507, 0.0
        %v610 = vmax.f32 %v512, 0.0
        %v611 = vmax.f32 %v517, 0.0
        %v612 = vmax.f32 %v522, 0.0
        %v613 = vmax.f32 %v527, 0.0
        %v614 = vmax.f32 %v532, 0.0
        %v615 = vmax.f32 %v537, 0.0
        %v616 = vmax.f32 %v542, 0.0
        %v617 = vmax.f32 %v547, 0.0
        %v618 = vmax.f32 %v552, 0.0
        %v619 = vmax.f32 %v557, 0.0
        %v620 = vmax.f32 %v562, 0.0
        %v621 = vmax.f32 %v567, 0.0
        %v622 = vmax.f32 %v572, 0.0
        %v623 = vmax.f32 %v577, 0.0
        %v624 = vmax.f32 %v582, 0.0
        %v625 = vmax.f32 %v587, 0.0
        %v626 = vmax.f32 %v592, 0.0
        %v627 = vld [vmem:[%s3] sm:$0xff]
        %v628 = vld [vmem:[%s3 + $0x8] sm:$0xff]
        %v629 = vld [vmem:[%s3 + $0x10] sm:$0xff]
        %v630 = vld [vmem:[%s3 + $0x18] sm:$0xff]
        %v631 = vld [vmem:[%s4] sm:$0x1]
        %v633 = vlaneseq
        %v634 = vshrl.u32 %v633, 7
        %v635 = vsub.s32 0, %v634
        %v636 = vrot.slane %v631, %v635
        %vm638 = vcmask 261120
        %v640 = vsel %vm638, %v595, 0
        %v643 = vsel %vm638, %v596, 0
        %v646 = vsel %vm638, %v597, 0
        %v649 = vsel %vm638, %v598, 0
        %v652 = vsel %vm638, %v599, 0
        %v655 = vsel %vm638, %v600, 0
        %v658 = vsel %vm638, %v601, 0
        %v661 = vsel %vm638, %v602, 0
        %v664 = vsel %vm638, %v603, 0
        %v667 = vsel %vm638, %v604, 0
        %v670 = vsel %vm638, %v605, 0
        %v673 = vsel %vm638, %v606, 0
        %v676 = vsel %vm638, %v607, 0
        %v679 = vsel %vm638, %v608, 0
        %v682 = vsel %vm638, %v609, 0
        %v685 = vsel %vm638, %v610, 0
        %v688 = vsel %vm638, %v611, 0
        %v691 = vsel %vm638, %v612, 0
        %v694 = vsel %vm638, %v613, 0
        %v697 = vsel %vm638, %v614, 0
        %v700 = vsel %vm638, %v615, 0
        %v703 = vsel %vm638, %v616, 0
        %v706 = vsel %vm638, %v617, 0
        %v709 = vsel %vm638, %v618, 0
        %v712 = vsel %vm638, %v619, 0
        %v715 = vsel %vm638, %v620, 0
        %v718 = vsel %vm638, %v621, 0
        %v721 = vsel %vm638, %v622, 0
        %v724 = vsel %vm638, %v623, 0
        %v727 = vsel %vm638, %v624, 0
        %v730 = vsel %vm638, %v625, 0
        %v733 = vsel %vm638, %v626, 0
        %735 = vmatprep.subr.mxu0 0.0
        %736 = vmatpush1.msra.mxu0 0.0
        %737 = vmatprep.subr.mxu0 0.0
        %738 = vmatpush1.msra.mxu0 0.0
        %739 = vmatprep.subr.mxu0 0.0
        %740 = vmatpush1.msra.mxu0 0.0
        %741 = vmatprep.subr.mxu0 0.0
        %742 = vmatpush1.msra.mxu0 0.0
        %743 = vmatprep.subr.mxu0 0.0
        %744 = vmatpush1.msra.mxu0 0.0
        %745 = vmatprep.subr.mxu0 0.0
        %746 = vmatpush1.msra.mxu0 0.0
        %747 = vmatprep.subr.mxu0 0.0
        %748 = vmatpush1.msra.mxu0 0.0
        %749 = vmatprep.subr.mxu0 0.0
        %750 = vmatpush1.msra.mxu0 0.0
        %751 = vmatprep.subr.mxu0 0.0
        %752 = vmatpush1.msra.mxu0 0.0
        %753 = vmatprep.subr.mxu0 0.0
        %754 = vmatpush1.msra.mxu0 0.0
        %755 = vmatprep.subr.mxu0 0.0
        %756 = vmatpush1.msra.mxu0 0.0
        %757 = vmatprep.subr.mxu0 0.0
        %758 = vmatpush1.msra.mxu0 0.0
        %759 = vmatprep.subr.mxu0 0.0
        %760 = vmatpush1.msra.mxu0 %v630
        %761 = vmatprep.subr.mxu0 0.0
        %762 = vmatpush1.msra.mxu0 %v629
        %763 = vmatprep.subr.mxu0 0.0
        %764 = vmatpush1.msra.mxu0 %v628
        %765 = vmatprep.subr.mxu0 0.0
        %766 = vmatpush1.msra.mxu0 %v627
        %767 = vmatprep.subr.mxu0 0.0
        %768 = vmatpush2.msra.mxu0 0.0
        %769 = vmatprep.subr.mxu0 0.0
        %770 = vmatpush2.msra.mxu0 0.0
        %771 = vmatprep.subr.mxu0 0.0
        %772 = vmatpush2.msra.mxu0 0.0
        %773 = vmatprep.subr.mxu0 0.0
        %774 = vmatpush2.msra.mxu0 0.0
        %775 = vmatprep.subr.mxu0 0.0
        %776 = vmatpush2.msra.mxu0 0.0
        %777 = vmatprep.subr.mxu0 0.0
        %778 = vmatpush2.msra.mxu0 0.0
        %779 = vmatprep.subr.mxu0 0.0
        %780 = vmatpush2.msra.mxu0 0.0
        %781 = vmatprep.subr.mxu0 0.0
        %782 = vmatpush2.msra.mxu0 0.0
        %783 = vmatprep.subr.mxu0 0.0
        %784 = vmatpush2.msra.mxu0 0.0
        %785 = vmatprep.subr.mxu0 0.0
        %786 = vmatpush2.msra.mxu0 0.0
        %787 = vmatprep.subr.mxu0 0.0
        %788 = vmatpush2.msra.mxu0 0.0
        %789 = vmatprep.subr.mxu0 0.0
        %790 = vmatpush2.msra.mxu0 0.0
        %791 = vmatprep.subr.mxu0 0.0
        %792 = vmatpush2.msra.mxu0 0.0
        %793 = vmatprep.subr.mxu0 0.0
        %794 = vmatpush2.msra.mxu0 0.0
        %795 = vmatprep.subr.mxu0 0.0
        %796 = vmatpush2.msra.mxu0 0.0
        %797 = vmatprep.subr.mxu0 0.0
        %798 = vmatpush2.msra.mxu0 0.0
        %799 = vmatprep.mubr.f32.mxu0 0.0
        %800 = vmatmul.mubr.f32.gmra.mxu0 %v640
        %v801 = vpop.f32.mrf.mxu0
        %v802 = vadd.f32 %v636, %v801
        %v803 = vpop.f32.mrf.mxu0
        %804 = vmatprep.mubr.f32.mxu0 0.0
        %805 = vmatmul.mubr.f32.gmra.mxu0 %v643
        %v806 = vpop.f32.mrf.mxu0
        %v807 = vadd.f32 %v636, %v806
        %v808 = vpop.f32.mrf.mxu0
        %809 = vmatprep.mubr.f32.mxu0 0.0
        %810 = vmatmul.mubr.f32.gmra.mxu0 %v646
        %v811 = vpop.f32.mrf.mxu0
        %v812 = vadd.f32 %v636, %v811
        %v813 = vpop.f32.mrf.mxu0
        %814 = vmatprep.mubr.f32.mxu0 0.0
        %815 = vmatmul.mubr.f32.gmra.mxu0 %v649
        %v816 = vpop.f32.mrf.mxu0
        %v817 = vadd.f32 %v636, %v816
        %v818 = vpop.f32.mrf.mxu0
        %819 = vmatprep.mubr.f32.mxu0 0.0
        %820 = vmatmul.mubr.f32.gmra.mxu0 %v652
        %v821 = vpop.f32.mrf.mxu0
        %v822 = vadd.f32 %v636, %v821
        %v823 = vpop.f32.mrf.mxu0
        %824 = vmatprep.mubr.f32.mxu0 0.0
        %825 = vmatmul.mubr.f32.gmra.mxu0 %v655
        %v826 = vpop.f32.mrf.mxu0
        %v827 = vadd.f32 %v636, %v826
        %v828 = vpop.f32.mrf.mxu0
        %829 = vmatprep.mubr.f32.mxu0 0.0
        %830 = vmatmul.mubr.f32.gmra.mxu0 %v658
        %v831 = vpop.f32.mrf.mxu0
        %v832 = vadd.f32 %v636, %v831
        %v833 = vpop.f32.mrf.mxu0
        %834 = vmatprep.mubr.f32.mxu0 0.0
        %835 = vmatmul.mubr.f32.gmra.mxu0 %v661
        %v836 = vpop.f32.mrf.mxu0
        %v837 = vadd.f32 %v636, %v836
        %v838 = vpop.f32.mrf.mxu0
        %839 = vmatprep.mubr.f32.mxu0 0.0
        %840 = vmatmul.mubr.f32.gmra.mxu0 %v664
        %v841 = vpop.f32.mrf.mxu0
        %v842 = vadd.f32 %v636, %v841
        %v843 = vpop.f32.mrf.mxu0
        %844 = vmatprep.mubr.f32.mxu0 0.0
        %845 = vmatmul.mubr.f32.gmra.mxu0 %v667
        %v846 = vpop.f32.mrf.mxu0
        %v847 = vadd.f32 %v636, %v846
        %v848 = vpop.f32.mrf.mxu0
        %849 = vmatprep.mubr.f32.mxu0 0.0
        %850 = vmatmul.mubr.f32.gmra.mxu0 %v670
        %v851 = vpop.f32.mrf.mxu0
        %v852 = vadd.f32 %v636, %v851
        %v853 = vpop.f32.mrf.mxu0
        %854 = vmatprep.mubr.f32.mxu0 0.0
        %855 = vmatmul.mubr.f32.gmra.mxu0 %v673
        %v856 = vpop.f32.mrf.mxu0
        %v857 = vadd.f32 %v636, %v856
        %v858 = vpop.f32.mrf.mxu0
        %859 = vmatprep.mubr.f32.mxu0 0.0
        %860 = vmatmul.mubr.f32.gmra.mxu0 %v676
        %v861 = vpop.f32.mrf.mxu0
        %v862 = vadd.f32 %v636, %v861
        %v863 = vpop.f32.mrf.mxu0
        %864 = vmatprep.mubr.f32.mxu0 0.0
        %865 = vmatmul.mubr.f32.gmra.mxu0 %v679
        %v866 = vpop.f32.mrf.mxu0
        %v867 = vadd.f32 %v636, %v866
        %v868 = vpop.f32.mrf.mxu0
        %869 = vmatprep.mubr.f32.mxu0 0.0
        %870 = vmatmul.mubr.f32.gmra.mxu0 %v682
        %v871 = vpop.f32.mrf.mxu0
        %v872 = vadd.f32 %v636, %v871
        %v873 = vpop.f32.mrf.mxu0
        %874 = vmatprep.mubr.f32.mxu0 0.0
        %875 = vmatmul.mubr.f32.gmra.mxu0 %v685
        %v876 = vpop.f32.mrf.mxu0
        %v877 = vadd.f32 %v636, %v876
        %v878 = vpop.f32.mrf.mxu0
        %879 = vmatprep.mubr.f32.mxu0 0.0
        %880 = vmatmul.mubr.f32.gmra.mxu0 %v688
        %v881 = vpop.f32.mrf.mxu0
        %v882 = vadd.f32 %v636, %v881
        %v883 = vpop.f32.mrf.mxu0
        %884 = vmatprep.mubr.f32.mxu0 0.0
        %885 = vmatmul.mubr.f32.gmra.mxu0 %v691
        %v886 = vpop.f32.mrf.mxu0
        %v887 = vadd.f32 %v636, %v886
        %v888 = vpop.f32.mrf.mxu0
        %889 = vmatprep.mubr.f32.mxu0 0.0
        %890 = vmatmul.mubr.f32.gmra.mxu0 %v694
        %v891 = vpop.f32.mrf.mxu0
        %v892 = vadd.f32 %v636, %v891
        %v893 = vpop.f32.mrf.mxu0
        %894 = vmatprep.mubr.f32.mxu0 0.0
        %895 = vmatmul.mubr.f32.gmra.mxu0 %v697
        %v896 = vpop.f32.mrf.mxu0
        %v897 = vadd.f32 %v636, %v896
        %v898 = vpop.f32.mrf.mxu0
        %899 = vmatprep.mubr.f32.mxu0 0.0
        %900 = vmatmul.mubr.f32.gmra.mxu0 %v700
        %v901 = vpop.f32.mrf.mxu0
        %v902 = vadd.f32 %v636, %v901
        %v903 = vpop.f32.mrf.mxu0
        %904 = vmatprep.mubr.f32.mxu0 0.0
        %905 = vmatmul.mubr.f32.gmra.mxu0 %v703
        %v906 = vpop.f32.mrf.mxu0
        %v907 = vadd.f32 %v636, %v906
        %v908 = vpop.f32.mrf.mxu0
        %909 = vmatprep.mubr.f32.mxu0 0.0
        %910 = vmatmul.mubr.f32.gmra.mxu0 %v706
        %v911 = vpop.f32.mrf.mxu0
        %v912 = vadd.f32 %v636, %v911
        %v913 = vpop.f32.mrf.mxu0
        %914 = vmatprep.mubr.f32.mxu0 0.0
        %915 = vmatmul.mubr.f32.gmra.mxu0 %v709
        %v916 = vpop.f32.mrf.mxu0
        %v917 = vadd.f32 %v636, %v916
        %v918 = vpop.f32.mrf.mxu0
        %919 = vmatprep.mubr.f32.mxu0 0.0
        %920 = vmatmul.mubr.f32.gmra.mxu0 %v712
        %v921 = vpop.f32.mrf.mxu0
        %v922 = vadd.f32 %v636, %v921
        %v923 = vpop.f32.mrf.mxu0
        %924 = vmatprep.mubr.f32.mxu0 0.0
        %925 = vmatmul.mubr.f32.gmra.mxu0 %v715
        %v926 = vpop.f32.mrf.mxu0
        %v927 = vadd.f32 %v636, %v926
        %v928 = vpop.f32.mrf.mxu0
        %929 = vmatprep.mubr.f32.mxu0 0.0
        %930 = vmatmul.mubr.f32.gmra.mxu0 %v718
        %v931 = vpop.f32.mrf.mxu0
        %v932 = vadd.f32 %v636, %v931
        %v933 = vpop.f32.mrf.mxu0
        %934 = vmatprep.mubr.f32.mxu0 0.0
        %935 = vmatmul.mubr.f32.gmra.mxu0 %v721
        %v936 = vpop.f32.mrf.mxu0
        %v937 = vadd.f32 %v636, %v936
        %v938 = vpop.f32.mrf.mxu0
        %939 = vmatprep.mubr.f32.mxu0 0.0
        %940 = vmatmul.mubr.f32.gmra.mxu0 %v724
        %v941 = vpop.f32.mrf.mxu0
        %v942 = vadd.f32 %v636, %v941
        %v943 = vpop.f32.mrf.mxu0
        %944 = vmatprep.mubr.f32.mxu0 0.0
        %945 = vmatmul.mubr.f32.gmra.mxu0 %v727
        %v946 = vpop.f32.mrf.mxu0
        %v947 = vadd.f32 %v636, %v946
        %v948 = vpop.f32.mrf.mxu0
        %949 = vmatprep.mubr.f32.mxu0 0.0
        %950 = vmatmul.mubr.f32.gmra.mxu0 %v730
        %v951 = vpop.f32.mrf.mxu0
        %v952 = vadd.f32 %v636, %v951
        %v953 = vpop.f32.mrf.mxu0
        %954 = vmatprep.mubr.f32.mxu0 0.0
        %955 = vmatmul.mubr.f32.gmra.mxu0 %v733
        %v956 = vpop.f32.mrf.mxu0
        %v957 = vadd.f32 %v636, %v956
        %v958 = vpop.f32.mrf.mxu0
        %959 = vdwg.mxu0
        %v960 = vlaneseq
        %v961 = vand.u32 %v960, 127
        %vm962 = vcmp.eq.s32.totalorder %v961, 16
        %v963 = vxor.u32 %v802, 2147483648
        %v964 = vxor.u32 %v807, 2147483648
        %v965 = vxor.u32 %v812, 2147483648
        %v966 = vxor.u32 %v817, 2147483648
        %v967 = vxor.u32 %v822, 2147483648
        %v968 = vxor.u32 %v827, 2147483648
        %v969 = vxor.u32 %v832, 2147483648
        %v970 = vxor.u32 %v837, 2147483648
        %v971 = vxor.u32 %v842, 2147483648
        %v972 = vxor.u32 %v847, 2147483648
        %v973 = vxor.u32 %v852, 2147483648
        %v974 = vxor.u32 %v857, 2147483648
        %v975 = vxor.u32 %v862, 2147483648
        %v976 = vxor.u32 %v867, 2147483648
        %v977 = vxor.u32 %v872, 2147483648
        %v978 = vxor.u32 %v877, 2147483648
        %v979 = vxor.u32 %v882, 2147483648
        %v980 = vxor.u32 %v887, 2147483648
        %v981 = vxor.u32 %v892, 2147483648
        %v982 = vxor.u32 %v897, 2147483648
        %v983 = vxor.u32 %v902, 2147483648
        %v984 = vxor.u32 %v907, 2147483648
        %v985 = vxor.u32 %v912, 2147483648
        %v986 = vxor.u32 %v917, 2147483648
        %v987 = vxor.u32 %v922, 2147483648
        %v988 = vxor.u32 %v927, 2147483648
        %v989 = vxor.u32 %v932, 2147483648
        %v990 = vxor.u32 %v937, 2147483648
        %v991 = vxor.u32 %v942, 2147483648
        %v992 = vxor.u32 %v947, 2147483648
        %v993 = vxor.u32 %v952, 2147483648
        %v994 = vxor.u32 %v957, 2147483648
        %v995 = vmul.f32 %v963, 1.442695
        %v996 = vpow.pop %v995
        %v997 = vmul.f32 %v964, 1.442695
        %v998 = vpow.pop %v997
        %v999 = vmul.f32 %v965, 1.442695
        %v1000 = vpow.pop %v999
        %v1001 = vmul.f32 %v966, 1.442695
        %v1002 = vpow.pop %v1001
        %v1003 = vmul.f32 %v967, 1.442695
        %v1004 = vpow.pop %v1003
        %v1005 = vmul.f32 %v968, 1.442695
        %v1006 = vpow.pop %v1005
        %v1007 = vmul.f32 %v969, 1.442695
        %v1008 = vpow.pop %v1007
        %v1009 = vmul.f32 %v970, 1.442695
        %v1010 = vpow.pop %v1009
        %v1011 = vmul.f32 %v971, 1.442695
        %v1012 = vpow.pop %v1011
        %v1013 = vmul.f32 %v972, 1.442695
        %v1014 = vpow.pop %v1013
        %v1015 = vmul.f32 %v973, 1.442695
        %v1016 = vpow.pop %v1015
        %v1017 = vmul.f32 %v974, 1.442695
        %v1018 = vpow.pop %v1017
        %v1019 = vmul.f32 %v975, 1.442695
        %v1020 = vpow.pop %v1019
        %v1021 = vmul.f32 %v976, 1.442695
        %v1022 = vpow.pop %v1021
        %v1023 = vmul.f32 %v977, 1.442695
        %v1024 = vpow.pop %v1023
        %v1025 = vmul.f32 %v978, 1.442695
        %v1026 = vpow.pop %v1025
        %v1027 = vmul.f32 %v979, 1.442695
        %v1028 = vpow.pop %v1027
        %v1029 = vmul.f32 %v980, 1.442695
        %v1030 = vpow.pop %v1029
        %v1031 = vmul.f32 %v981, 1.442695
        %v1032 = vpow.pop %v1031
        %v1033 = vmul.f32 %v982, 1.442695
        %v1034 = vpow.pop %v1033
        %v1035 = vmul.f32 %v983, 1.442695
        %v1036 = vpow.pop %v1035
        %v1037 = vmul.f32 %v984, 1.442695
        %v1038 = vpow.pop %v1037
        %v1039 = vmul.f32 %v985, 1.442695
        %v1040 = vpow.pop %v1039
        %v1041 = vmul.f32 %v986, 1.442695
        %v1042 = vpow.pop %v1041
        %v1043 = vmul.f32 %v987, 1.442695
        %v1044 = vpow.pop %v1043
        %v1045 = vmul.f32 %v988, 1.442695
        %v1046 = vpow.pop %v1045
        %v1047 = vmul.f32 %v989, 1.442695
        %v1048 = vpow.pop %v1047
        %v1049 = vmul.f32 %v990, 1.442695
        %v1050 = vpow.pop %v1049
        %v1051 = vmul.f32 %v991, 1.442695
        %v1052 = vpow.pop %v1051
        %v1053 = vmul.f32 %v992, 1.442695
        %v1054 = vpow.pop %v1053
        %v1055 = vmul.f32 %v993, 1.442695
        %v1056 = vpow.pop %v1055
        %v1057 = vmul.f32 %v994, 1.442695
        %v1058 = vpow.pop %v1057
        %v1059 = vadd.f32 %v996, 1.0
        %v1060 = vadd.f32 %v998, 1.0
        %v1061 = vadd.f32 %v1000, 1.0
        %v1062 = vadd.f32 %v1002, 1.0
        %v1063 = vadd.f32 %v1004, 1.0
        %v1064 = vadd.f32 %v1006, 1.0
        %v1065 = vadd.f32 %v1008, 1.0
        %v1066 = vadd.f32 %v1010, 1.0
        %v1067 = vadd.f32 %v1012, 1.0
        %v1068 = vadd.f32 %v1014, 1.0
        %v1069 = vadd.f32 %v1016, 1.0
        %v1070 = vadd.f32 %v1018, 1.0
        %v1071 = vadd.f32 %v1020, 1.0
        %v1072 = vadd.f32 %v1022, 1.0
        %v1073 = vadd.f32 %v1024, 1.0
        %v1074 = vadd.f32 %v1026, 1.0
        %v1075 = vadd.f32 %v1028, 1.0
        %v1076 = vadd.f32 %v1030, 1.0
        %v1077 = vadd.f32 %v1032, 1.0
        %v1078 = vadd.f32 %v1034, 1.0
        %v1079 = vadd.f32 %v1036, 1.0
        %v1080 = vadd.f32 %v1038, 1.0
        %v1081 = vadd.f32 %v1040, 1.0
        %v1082 = vadd.f32 %v1042, 1.0
        %v1083 = vadd.f32 %v1044, 1.0
        %v1084 = vadd.f32 %v1046, 1.0
        %v1085 = vadd.f32 %v1048, 1.0
        %v1086 = vadd.f32 %v1050, 1.0
        %v1087 = vadd.f32 %v1052, 1.0
        %v1088 = vadd.f32 %v1054, 1.0
        %v1089 = vadd.f32 %v1056, 1.0
        %v1090 = vadd.f32 %v1058, 1.0
        %v1091 = vrcp.pop %v1059
        %v1092 = vmul.f32 1.0, %v1091
        %v1093 = vrcp.pop %v1060
        %v1094 = vmul.f32 1.0, %v1093
        %v1095 = vrcp.pop %v1061
        %v1096 = vmul.f32 1.0, %v1095
        %v1097 = vrcp.pop %v1062
        %v1098 = vmul.f32 1.0, %v1097
        %v1099 = vrcp.pop %v1063
        %v1100 = vmul.f32 1.0, %v1099
        %v1101 = vrcp.pop %v1064
        %v1102 = vmul.f32 1.0, %v1101
        %v1103 = vrcp.pop %v1065
        %v1104 = vmul.f32 1.0, %v1103
        %v1105 = vrcp.pop %v1066
        %v1106 = vmul.f32 1.0, %v1105
        %v1107 = vrcp.pop %v1067
        %v1108 = vmul.f32 1.0, %v1107
        %v1109 = vrcp.pop %v1068
        %v1110 = vmul.f32 1.0, %v1109
        %v1111 = vrcp.pop %v1069
        %v1112 = vmul.f32 1.0, %v1111
        %v1113 = vrcp.pop %v1070
        %v1114 = vmul.f32 1.0, %v1113
        %v1115 = vrcp.pop %v1071
        %v1116 = vmul.f32 1.0, %v1115
        %v1117 = vrcp.pop %v1072
        %v1118 = vmul.f32 1.0, %v1117
        %v1119 = vrcp.pop %v1073
        %v1120 = vmul.f32 1.0, %v1119
        %v1121 = vrcp.pop %v1074
        %v1122 = vmul.f32 1.0, %v1121
        %v1123 = vrcp.pop %v1075
        %v1124 = vmul.f32 1.0, %v1123
        %v1125 = vrcp.pop %v1076
        %v1126 = vmul.f32 1.0, %v1125
        %v1127 = vrcp.pop %v1077
        %v1128 = vmul.f32 1.0, %v1127
        %v1129 = vrcp.pop %v1078
        %v1130 = vmul.f32 1.0, %v1129
        %v1131 = vrcp.pop %v1079
        %v1132 = vmul.f32 1.0, %v1131
        %v1133 = vrcp.pop %v1080
        %v1134 = vmul.f32 1.0, %v1133
        %v1135 = vrcp.pop %v1081
        %v1136 = vmul.f32 1.0, %v1135
        %v1137 = vrcp.pop %v1082
        %v1138 = vmul.f32 1.0, %v1137
        %v1139 = vrcp.pop %v1083
        %v1140 = vmul.f32 1.0, %v1139
        %v1141 = vrcp.pop %v1084
        %v1142 = vmul.f32 1.0, %v1141
        %v1143 = vrcp.pop %v1085
        %v1144 = vmul.f32 1.0, %v1143
        %v1145 = vrcp.pop %v1086
        %v1146 = vmul.f32 1.0, %v1145
        %v1147 = vrcp.pop %v1087
        %v1148 = vmul.f32 1.0, %v1147
        %v1149 = vrcp.pop %v1088
        %v1150 = vmul.f32 1.0, %v1149
        %v1151 = vrcp.pop %v1089
        %v1152 = vmul.f32 1.0, %v1151
        %v1153 = vrcp.pop %v1090
        %v1154 = vmul.f32 1.0, %v1153
        %v1155 = vsel %vm962, %v1092, %v802
        %v1156 = vsel %vm962, %v1094, %v807
        %v1157 = vsel %vm962, %v1096, %v812
        %v1158 = vsel %vm962, %v1098, %v817
        %v1159 = vsel %vm962, %v1100, %v822
        %v1160 = vsel %vm962, %v1102, %v827
        %v1161 = vsel %vm962, %v1104, %v832
        %v1162 = vsel %vm962, %v1106, %v837
        %v1163 = vsel %vm962, %v1108, %v842
        %v1164 = vsel %vm962, %v1110, %v847
        %v1165 = vsel %vm962, %v1112, %v852
        %v1166 = vsel %vm962, %v1114, %v857
        %v1167 = vsel %vm962, %v1116, %v862
        %v1168 = vsel %vm962, %v1118, %v867
        %v1169 = vsel %vm962, %v1120, %v872
        %v1170 = vsel %vm962, %v1122, %v877
        %v1171 = vsel %vm962, %v1124, %v882
        %v1172 = vsel %vm962, %v1126, %v887
        %v1173 = vsel %vm962, %v1128, %v892
        %v1174 = vsel %vm962, %v1130, %v897
        %v1175 = vsel %vm962, %v1132, %v902
        %v1176 = vsel %vm962, %v1134, %v907
        %v1177 = vsel %vm962, %v1136, %v912
        %v1178 = vsel %vm962, %v1138, %v917
        %v1179 = vsel %vm962, %v1140, %v922
        %v1180 = vsel %vm962, %v1142, %v927
        %v1181 = vsel %vm962, %v1144, %v932
        %v1182 = vsel %vm962, %v1146, %v937
        %v1183 = vsel %vm962, %v1148, %v942
        %v1184 = vsel %vm962, %v1150, %v947
        %v1185 = vsel %vm962, %v1152, %v952
        %v1186 = vsel %vm962, %v1154, %v957
        %1187 = vst [vmem:[%s218] sm:$0xff] %v1155
        %1188 = vst [vmem:[%s218 + $0x8] sm:$0xff] %v1156
        %1189 = vst [vmem:[%s218 + $0x10] sm:$0xff] %v1157
        %1190 = vst [vmem:[%s218 + $0x18] sm:$0xff] %v1158
        %1191 = vst [vmem:[%s218 + $0x20] sm:$0xff] %v1159
        %1192 = vst [vmem:[%s218 + $0x28] sm:$0xff] %v1160
        %1193 = vst [vmem:[%s218 + $0x30] sm:$0xff] %v1161
        %1194 = vst [vmem:[%s218 + $0x38] sm:$0xff] %v1162
        %1195 = vst [vmem:[%s218 + $0x40] sm:$0xff] %v1163
        %1196 = vst [vmem:[%s218 + $0x48] sm:$0xff] %v1164
        %1197 = vst [vmem:[%s218 + $0x50] sm:$0xff] %v1165
        %1198 = vst [vmem:[%s218 + $0x58] sm:$0xff] %v1166
        %1199 = vst [vmem:[%s218 + $0x60] sm:$0xff] %v1167
        %1200 = vst [vmem:[%s218 + $0x68] sm:$0xff] %v1168
        %1201 = vst [vmem:[%s218 + $0x70] sm:$0xff] %v1169
        %1202 = vst [vmem:[%s218 + $0x78] sm:$0xff] %v1170
        %1203 = vst [vmem:[%s218 + $0x80] sm:$0xff] %v1171
        %1204 = vst [vmem:[%s218 + $0x88] sm:$0xff] %v1172
        %1205 = vst [vmem:[%s218 + $0x90] sm:$0xff] %v1173
        %1206 = vst [vmem:[%s218 + $0x98] sm:$0xff] %v1174
        %1207 = vst [vmem:[%s218 + $0xa0] sm:$0xff] %v1175
        %1208 = vst [vmem:[%s218 + $0xa8] sm:$0xff] %v1176
        %1209 = vst [vmem:[%s218 + $0xb0] sm:$0xff] %v1177
        %1210 = vst [vmem:[%s218 + $0xb8] sm:$0xff] %v1178
        %1211 = vst [vmem:[%s218 + $0xc0] sm:$0xff] %v1179
        %1212 = vst [vmem:[%s218 + $0xc8] sm:$0xff] %v1180
        %1213 = vst [vmem:[%s218 + $0xd0] sm:$0xff] %v1181
        %1214 = vst [vmem:[%s218 + $0xd8] sm:$0xff] %v1182
        %1215 = vst [vmem:[%s218 + $0xe0] sm:$0xff] %v1183
        %1216 = vst [vmem:[%s218 + $0xe8] sm:$0xff] %v1184
        %1217 = vst [vmem:[%s218 + $0xf0] sm:$0xff] %v1185
        %1218 = vst [vmem:[%s218 + $0xf8] sm:$0xff] %v1186
        %s1219 = sand.u32 %s137, 1
        %s1220 = scalar_lea.sflag [#allocation3], %s1219
        %s1221 = sand.u32 %s137, 1
        %s1222 = smul.addr %s1221, 256
        %s1223 = scalar_lea.vmem [#allocation2], %s1222
        // Predicated region
        $region41: #{tpu_custom_call.1} parent=39 // pred_check
          %p1224 = pneg %p147
        $region42: #{tpu_custom_call.1} parent=39 // pred_check_branch
          %1226 = sbr.rel (%p1224) target = $region44
        $region43: #{tpu_custom_call.1} parent=39 // pred_region
          %s1227 = smul.u32 32, %s19
          %s1229 = ssub.s32 4096, 4096
          %1230 = vsyncadd %s1220, %s1229
          %s1231 = smul.addr %s1227, 128
          %s1232 = scalar_lea.hbm %s5, %s1231
          %s1233 = sshll.u32 %s1223, 4
          %s1234 = int_to_ptr.vmem [resolvable:$true] %s1233
          %1239 = dma.vmem_to_hbm [thread:$0]  %s1234, 4096, %s1232, %s1220, 128, 128, 8
        $region44: #{tpu_custom_call.1} parent=39 // pred_fallthru
          _
      $region40: #{tpu_custom_call.1} parent=5 // pred_fallthru
        _
      %p1240 = scmp.le.s32.totalorder 2, %s14
      // Predicated region
      $region45: #{tpu_custom_call.1} parent=5 // pred_check
        %p1241 = pneg %p1240
      $region46: #{tpu_custom_call.1} parent=5 // pred_check_branch
        %1243 = sbr.rel (%p1241) target = $region48
      $region47: #{tpu_custom_call.1} parent=5 // pred_region
        %s1244 = ssub.s32 %s14, 2
        // Predicated region
        $region49: #{tpu_custom_call.1} parent=47 // pred_check
          %p1245 = pneg %p153
        $region50: #{tpu_custom_call.1} parent=47 // pred_check_branch
          %1247 = sbr.rel (%p1245) target = $region52
        $region51: #{tpu_custom_call.1} parent=47 // pred_region
          %s1248 = sand.u32 %s138, 1
          %s1249 = scalar_lea.sflag [#allocation3], %s1248
          %s1250 = sand.u32 %s138, 1
          %s1251 = smul.addr %s1250, 256
          %s1252 = scalar_lea.vmem [#allocation2], %s1251
          %1253 = dma.done %s1249, 4096
        $region52: #{tpu_custom_call.1} parent=47 // pred_fallthru
          _
      $region48: #{tpu_custom_call.1} parent=5 // pred_fallthru
        _
    $region6: #{tpu_custom_call.1} parent=1 // loop_footer
      %s18 = sadd.s32 1, %s14
    $region7: #{tpu_custom_call.1} parent=1 // loop_footer_branch
      %13 = sbr.rel target = $region3
    $region8: #{tpu_custom_call.1} parent=1 // loop_exit
      _
    %1254 = vsyncpa [#allocation3], 1
    %s1255 = scalar_lea.sflag [#allocation3], 1
    %1256 = vsyncpa %s1255, 1

</llo_original>
